<compile_context>
chip_gen: v5e
topology: v5e:2x2
jax: 0.10.0
libtpu: 0.0.40
codegen_flags: <defaults>
</compile_context>

<pallas_src>
import functools

import jax
import jax.numpy as jnp
from jax.experimental import pallas as pl
from jax.experimental.pallas import tpu as pltpu


def _relu_kernel(x_ref, o_ref):
    # Pure VPU elementwise work on one (row_tile, 128) f32 tile.
    o_ref[...] = jnp.maximum(x_ref[...], 0.0)


def _choose_row_tile(rows: int, row_tile: int) -> int:
    """Pick a row tile that is (8,128)-legal and avoids pointless splitting."""
    if rows <= row_tile:
        # Single grid step covering the full row extent. A full-array block
        # shape is always legal, and forcing >=2 steps on small inputs only
        # adds per-step overhead on 1-TensorCore chips (v5e/v6e).
        return rows
    # Multi-step grid: block rows must be a multiple of 8; the ragged final
    # block (if any) is handled by Pallas masking.
    return max(8, (row_tile // 8) * 8)


@functools.partial(jax.jit, static_argnames=("row_tile",))
def _complex_relu_c64(x: jax.Array, *, row_tile: int) -> jax.Array:
    """ReLU on real & imaginary parts of a complex64 array via one Pallas pass."""
    orig_shape = x.shape
    lanes = 128

    # Interleaved packing along the LAST axis: byte-compatible with complex64
    # storage -> cheap, fusible marshalling (and prerequisite for any future
    # bitcast path). ReLU is elementwise, so it distributes over this layout.
    planes = jnp.stack([jnp.real(x), jnp.imag(x)], axis=-1)  # (*shape, 2) f32
    total = planes.size                                      # == 2 * x.size
    flat = planes.reshape(-1)

    if total % lanes == 0:
        rows = total // lanes
        slab = flat.reshape(rows, lanes)
        padded = False
    else:
        # Rare slow path (x.size % 64 != 0): tiny tail pad, one extra copy.
        rows = pl.cdiv(total, lanes)
        slab = jnp.pad(flat, (0, rows * lanes - total)).reshape(rows, lanes)
        padded = True

    rt = _choose_row_tile(rows, row_tile)
    grid = (pl.cdiv(rows, rt),)
    spec = pl.BlockSpec((rt, lanes), lambda i: (i, 0))

    out_slab = pl.pallas_call(
        _relu_kernel,
        out_shape=jax.ShapeDtypeStruct((rows, lanes), jnp.float32),
        grid_spec=pltpu.PrefetchScalarGridSpec(
            num_scalar_prefetch=0,
            grid=grid,
            in_specs=[spec],
            out_specs=spec,
        ),
        compiler_params=pltpu.CompilerParams(
            dimension_semantics=("parallel",),
            vmem_limit_bytes=48 << 20,
            # Let XLA fuse the real/imag-extraction producer into the kernel's
            # input side instead of materializing the slab in HBM.
            allow_input_fusion=[True],
        ),
    )(slab)

    out_flat = out_slab.reshape(-1)
    if padded:
        out_flat = out_flat[:total]
    out_planes = out_flat.reshape(orig_shape + (2,))
    return jax.lax.complex(out_planes[..., 0], out_planes[..., 1])


def complex_activation(x: jax.Array, *, row_tile: int = 8192) -> jax.Array:
    """ComplexActivation forward: ReLU on real and imag parts of `x`."""
    if x.dtype == jnp.complex64:
        return _complex_relu_c64(x, row_tile=row_tile)
    if jnp.issubdtype(x.dtype, jnp.complexfloating):
        # Precision-safe fallback (e.g. complex128 under x64): no downcast.
        return jax.lax.complex(
            jnp.maximum(jnp.real(x), 0), jnp.maximum(jnp.imag(x), 0)
        )
    raise TypeError(f"ComplexActivation expects a complex input, got {x.dtype}")


if __name__ == "__main__":
    key = jax.random.PRNGKey(0)
    k_re, k_im = jax.random.split(key)
    shape = (2, 4, 16, 16)  # NCHW, small deterministic example
    x_re = jax.random.normal(k_re, shape, dtype=jnp.float32)
    x_im = jax.random.normal(k_im, shape, dtype=jnp.float32)
    x = jax.lax.complex(x_re, x_im)  # complex64

    out = complex_activation(x)
    out = jax.block_until_ready(out)

    # Reference check (pure JAX)
    ref = jax.lax.complex(jnp.maximum(x_re, 0.0), jnp.maximum(x_im, 0.0))
    assert out.dtype == jnp.complex64
    assert out.shape == shape
    assert jnp.allclose(out, ref), "mismatch vs reference"

    print("KERNEL_OK")
</pallas_src>

<mosaic_0001>
module attributes {stable_mosaic.version = 11 : i64} {
  func.func @_relu_kernel(%arg0: i32, %arg1: memref<32x128xf32, #tpu.memory_space<vmem>>, %arg2: memref<32x128xf32, #tpu.memory_space<vmem>>) attributes {dimension_semantics = [#tpu.dimension_semantics<parallel>], iteration_bounds = array<i64: 1>, scalar_prefetch = 0 : i64, scratch_operands = 0 : i64, tpu.core_type = #tpu.core_type<tc>, window_params = [{transform_indices = @transform_0, window_bounds = array<i64: 32, 128>}, {transform_indices = @transform_1, window_bounds = array<i64: 32, 128>}]} {
    %c0 = arith.constant 0 : index
    %c0_0 = arith.constant 0 : index
    %0 = vector.load %arg1[%c0, %c0_0] : memref<32x128xf32, #tpu.memory_space<vmem>>, vector<32x128xf32>
    %cst = arith.constant 0.000000e+00 : f32
    %1 = vector.broadcast %cst : f32 to vector<32x128xf32>
    %2 = arith.maximumf %0, %1 : vector<32x128xf32>
    %c0_1 = arith.constant 0 : index
    %c0_2 = arith.constant 0 : index
    %3 = vector.load %arg2[%c0_1, %c0_2] : memref<32x128xf32, #tpu.memory_space<vmem>>, vector<32x128xf32>
    tpu.vector_store %arg2[%c0_1, %c0_2], %2 {strides = array<i32>} : memref<32x128xf32, #tpu.memory_space<vmem>>, vector<32x128xf32>,
    return
  }
  func.func @transform_0(%arg0: i32) -> (i32, i32) {
    %c0_i32 = arith.constant 0 : i32
    %c0_i32_0 = arith.constant 0 : i32
    return %arg0, %c0_i32 : i32, i32
  }
  func.func @transform_1(%arg0: i32) -> (i32, i32) {
    %c0_i32 = arith.constant 0 : i32
    %c0_i32_0 = arith.constant 0 : i32
    return %arg0, %c0_i32 : i32, i32
  }
}

</mosaic_0001>

<llo_original>
// kernel: custom-call.1
$region0: #{custom-call.1}
  %s0 = inlined_call_operand.hbm [shape: c64[2,4,16,16], index: 0, kind: input, shape index: {}]
  %s1 = inlined_call_operand.vmem [shape: f32[2,4,16,16], index: 1, kind: output, shape index: {}]
  %s2 = scalar_lea.hbm %s0, 128
  $region1: #{custom-call.1} parent=0
    #allocation0 [shape = 's32[1]{0}', space=sflag, size = 0x4, scoped, tag = 'scoped memory for custom-call.1']
    %3 = vsyncpa [#allocation0], 0
    %s5 = sshll.u32 %s2, 4
    %s6 = int_to_ptr.hbm [resolvable:$true] %s5
    %s7 = sshll.u32 %s1, 4
    %s8 = int_to_ptr.vmem [resolvable:$true] %s7
    %10 = dma.hbm_to_vmem [thread:$0]  %s6, 2048, %s8, [#allocation0]
    %12 = dma.done [#allocation0], 2048
    %13 = vsyncpa [#allocation0], 1

// kernel: custom-call
$region0: #{custom-call}
  %s0 = inlined_call_operand.hbm [shape: c64[2,4,16,16], index: 0, kind: input, shape index: {}]
  %s1 = inlined_call_operand.vmem [shape: f32[2,4,16,16], index: 1, kind: output, shape index: {}]
  $region1: #{custom-call} parent=0
    #allocation0 [shape = 's32[1]{0}', space=sflag, size = 0x4, scoped, tag = 'scoped memory for custom-call']
    %2 = vsyncpa [#allocation0], 0
    %s4 = sshll.u32 %s0, 4
    %s5 = int_to_ptr.hbm [resolvable:$true] %s4
    %s6 = sshll.u32 %s1, 4
    %s7 = int_to_ptr.vmem [resolvable:$true] %s6
    %9 = dma.hbm_to_vmem [thread:$0]  %s5, 2048, %s7, [#allocation0]
    %11 = dma.done [#allocation0], 2048
    %12 = vsyncpa [#allocation0], 1

// kernel: _complex_relu_c64.1
$region0: #{_complex_relu_c64.1}
  #allocation0 [shape = 'u32[]', space=smem, size = 0x4, offset = 0x4, fixed_abs, tag = 'smem constant byte address 0x4 - core index']
  #allocation1 [shape = 'u32[72,128]{1,0:T(1,128)}', space=vmem, size = 0x9000, scoped, tag = 'internal scratch']
  %s0 = inlined_call_operand.vmem [shape: f32[32,128], index: 0, kind: input, shape index: {}]
  %s1 = inlined_call_operand.vmem [shape: f32[32,128], index: 1, kind: output, shape index: {}]
  %s2 = sld [smem:[#allocation0]]
  $region14: #{_complex_relu_c64.1} parent=0
    _
  %s4 = ssub.s32 1, %s2
  %s5 = scalar_select 0, %s4, %s2
  // Predicated region
  $region2: #{_complex_relu_c64.1} parent=0 // pred_check
    _
  $region3: #{_complex_relu_c64.1} parent=0 // pred_check_branch
    %7 = sbr.rel (0) target = $region5
  $region4: #{_complex_relu_c64.1} parent=0 // pred_region
    _
  $region5: #{_complex_relu_c64.1} parent=0 // pred_fallthru
    _
  %v8 = vld [vmem:[%s0] sm:$0xff]
  %v9 = vld [vmem:[%s0 + $0x8] sm:$0xff]
  %v10 = vld [vmem:[%s0 + $0x10] sm:$0xff]
  %v11 = vld [vmem:[%s0 + $0x18] sm:$0xff]
  %v12 = vmax.f32 %v8, 0.0
  %v13 = vmax.f32 %v9, 0.0
  %v14 = vmax.f32 %v10, 0.0
  %v15 = vmax.f32 %v11, 0.0
  %16 = vst [vmem:[%s1] sm:$0xff] %v12
  %17 = vst [vmem:[%s1 + $0x8] sm:$0xff] %v13
  %18 = vst [vmem:[%s1 + $0x10] sm:$0xff] %v14
  %19 = vst [vmem:[%s1 + $0x18] sm:$0xff] %v15
  // Predicated region
  $region6: #{_complex_relu_c64.1} parent=0 // pred_check
    _
  $region7: #{_complex_relu_c64.1} parent=0 // pred_check_branch
    %21 = sbr.rel (0) target = $region9
  $region8: #{_complex_relu_c64.1} parent=0 // pred_region
    _
  $region9: #{_complex_relu_c64.1} parent=0 // pred_fallthru
    _
  // Predicated region
  $region10: #{_complex_relu_c64.1} parent=0 // pred_check
    _
  $region11: #{_complex_relu_c64.1} parent=0 // pred_check_branch
    %23 = sbr.rel (0) target = $region13
  $region12: #{_complex_relu_c64.1} parent=0 // pred_region
    _
  $region13: #{_complex_relu_c64.1} parent=0 // pred_fallthru
    _

// kernel: custom-call.2
$region0: #{custom-call.2}
  %s0 = inlined_call_operand.vmem [shape: f32[2,4,16,16], index: 0, kind: input, shape index: {}]
  %s1 = inlined_call_operand.vmem [shape: f32[2,4,16,16], index: 1, kind: input, shape index: {}]
  %s2 = inlined_call_operand.hbm [shape: c64[2,4,16,16], index: 2, kind: output, shape index: {}]
  %s3 = scalar_lea.hbm %s2, 128
  $region1: #{custom-call.2} parent=0
    #allocation0 [shape = 's32[1]{0}', space=sflag, size = 0x4, scoped, tag = 'scoped memory for custom-call.2']
    %4 = vsyncpa [#allocation0], 0
    %s6 = sshll.u32 %s0, 4
    %s7 = int_to_ptr.vmem [resolvable:$true] %s6
    %s8 = sshll.u32 %s2, 4
    %s9 = int_to_ptr.hbm [resolvable:$true] %s8
    %11 = dma.vmem_to_hbm [thread:$0]  %s7, 2048, %s9, [#allocation0]
    %13 = dma.done [#allocation0], 2048
    %14 = vsyncpa [#allocation0], 1
  $region2: #{custom-call.2} parent=0
    #allocation1 [shape = 's32[1]{0}', space=sflag, size = 0x4, scoped, tag = 'scoped memory for custom-call.2']
    %15 = vsyncpa [#allocation1], 0
    %s17 = sshll.u32 %s1, 4
    %s18 = int_to_ptr.vmem [resolvable:$true] %s17
    %s19 = sshll.u32 %s3, 4
    %s20 = int_to_ptr.hbm [resolvable:$true] %s19
    %22 = dma.vmem_to_hbm [thread:$0]  %s18, 2048, %s20, [#allocation1]
    %24 = dma.done [#allocation1], 2048
    %25 = vsyncpa [#allocation1], 1

</llo_original>
